<compile_context>
chip_gen: v7x
topology: tpu7x:2x2x1
jax: 0.10.0
libtpu: 0.0.40
codegen_flags: <defaults>
</compile_context>

<pallas_src>
import jax
import jax.numpy as jnp
from jax.experimental import pallas as pl
from jax.experimental.pallas import tpu as pltpu


def clip_head_kernel(h_ref, w_ref, b_ref, o_ref):
    # h_ref: (TB, S, H)  w_ref: (C_pad, H) native dtype  b_ref: (1, C_pad) f32
    # o_ref: (TB, C_pad) f32
    h = h_ref[...]
    s = h.shape[1]
    # mean over tokens 1: (skip CLS) == (sum over all tokens - CLS) / (S - 1).
    # Accumulate in f32 without materializing an f32 copy of the whole h tile.
    total = jnp.sum(h, axis=1, dtype=jnp.float32)            # (TB, H) f32
    cls = h[:, 0, :].astype(jnp.float32)                     # (TB, H) f32
    pooled = (total - cls) * (1.0 / (s - 1))                 # (TB, H) f32
    # Linear head: pooled @ W^T + b.  The resident weight is used in its native
    # dtype (no per-step up-cast); only the tiny pooled tensor is cast.
    w = w_ref[...]
    logits = jax.lax.dot_general(
        pooled.astype(w.dtype), w,
        dimension_numbers=(((1,), (1,)), ((), ())),
        preferred_element_type=jnp.float32,
    ) + b_ref[...]                                           # bias already f32
    o_ref[...] = logits.astype(o_ref.dtype)


def _tpu_vmem_capacity_bytes():
    """Best-effort query of per-core VMEM capacity; None if unknown."""
    try:
        info = pltpu.get_tpu_info()
        cap = getattr(info, "vmem_capacity_bytes", None)
        if cap:
            return int(cap)
    except Exception:
        pass
    return None


def clip_classifier_forward(h, head_w, head_b):
    """h: [B, S, H] last_hidden_state; head_w: [C, H]; head_b: [C] -> logits [B, C]."""
    B, S, H = h.shape
    C = head_w.shape[0]

    # Lane-dense class dimension: pad C up to a multiple of 128.
    C_pad = max(128, ((C + 127) // 128) * 128)
    if C_pad != C:
        head_w = jnp.pad(head_w, ((0, C_pad - C), (0, 0)))
        head_b = jnp.pad(head_b, ((0, C_pad - C),))
    b2d = head_b.astype(jnp.float32).reshape(1, C_pad)        # cast once, not per step

    # ---- generation-aware VMEM budget & batch-tile sizing -------------------
    vmem_cap = _tpu_vmem_capacity_bytes()
    if vmem_cap is not None and vmem_cap >= 100 * 1024 * 1024:
        # v5e / v6e: 128 MiB physical VMEM.
        vmem_limit = 64 * 1024 * 1024
        target_block = 16 * 1024 * 1024
        small_vmem = False
    else:
        # v7x (64 MiB physical per TC) or unknown -> conservative.
        vmem_limit = 48 * 1024 * 1024
        target_block = 12 * 1024 * 1024
        small_vmem = True

    n_h_buffers = 3                                           # pl.Buffered(3) on h
    w_bytes = C_pad * H * head_w.dtype.itemsize
    budget = vmem_limit - 2 * w_bytes - 2 * 1024 * 1024       # weight dbl-buf + slack
    block_bytes = max(1, min(target_block, budget // n_h_buffers))

    per_row = S * H * h.dtype.itemsize
    tb = block_bytes // per_row
    if tb >= B:
        tb = B                                                # whole batch, single block
    else:
        # Sublane-aligned partial blocks; never drop below 8 rows.
        tb = min(B, max(8, (tb // 8) * 8))

    n_blocks = pl.cdiv(B, tb)

    # On 2-TensorCore chips (v7x) prefer an even grid so the "parallel" batch
    # axis splits the bandwidth-bound stream evenly across cores.
    if small_vmem and n_blocks > 1 and n_blocks % 2 == 1:
        for n_try in (n_blocks + 1, n_blocks - 1):
            if n_try < 2:
                continue
            t = min(B, ((pl.cdiv(B, n_try) + 7) // 8) * 8)
            if t >= 8 and t * per_row * n_h_buffers <= budget and pl.cdiv(B, t) % 2 == 0:
                tb = t
                n_blocks = pl.cdiv(B, t)
                break

    # Streamed h input: 3-deep pipeline only when there are enough grid steps
    # for it to matter; otherwise keep the default double buffering.
    if n_blocks > 2:
        h_spec = pl.BlockSpec((tb, S, H), lambda i: (i, 0, 0),
                              pipeline_mode=pl.Buffered(3))
    else:
        h_spec = pl.BlockSpec((tb, S, H), lambda i: (i, 0, 0))

    cost = pl.CostEstimate(
        flops=2 * B * H * C_pad + B * S * H,
        transcendentals=0,
        bytes_accessed=(B * S * H * h.dtype.itemsize
                        + C_pad * H * head_w.dtype.itemsize
                        + B * C_pad * 4),
    )

    out = pl.pallas_call(
        clip_head_kernel,
        out_shape=jax.ShapeDtypeStruct((B, C_pad), jnp.float32),
        grid_spec=pltpu.PrefetchScalarGridSpec(
            num_scalar_prefetch=0,
            grid=(n_blocks,),
            in_specs=[
                h_spec,                                          # streamed h
                pl.BlockSpec((C_pad, H), lambda i: (0, 0)),      # resident weight
                pl.BlockSpec((1, C_pad), lambda i: (0, 0)),      # resident bias (f32)
            ],
            out_specs=pl.BlockSpec((tb, C_pad), lambda i: (i, 0)),
        ),
        compiler_params=pltpu.CompilerParams(
            dimension_semantics=("parallel",),
            vmem_limit_bytes=vmem_limit,
        ),
        cost_estimate=cost,
    )(h, head_w, b2d)

    # Drop class padding (and, implicitly, any partial-block garbage rows are
    # never produced here since the row dim is exactly B).
    return out[:, :C]


if __name__ == "__main__":
    # Small shapes consistent with the forward pass:
    #   batch=2, seq=8 (1 CLS + 7 patch tokens), hidden=32, num_classes=16
    B, S, H, C = 2, 8, 32, 16

    key = jax.random.PRNGKey(0)
    k_h, k_w, k_b = jax.random.split(key, 3)

    # Synthetic "last_hidden_state" from the frozen CLIP backbone.
    h = jax.random.normal(k_h, (B, S, H), dtype=jnp.float32)
    # Deterministic head parameters (nn.Linear(hidden_size, num_classes)).
    head_w = jax.random.normal(k_w, (C, H), dtype=jnp.float32) * 0.02
    head_b = jax.random.normal(k_b, (C,), dtype=jnp.float32) * 0.02

    logits = clip_classifier_forward(h, head_w, head_b)
    logits = jax.block_until_ready(logits)

    # Reference check in plain JAX (same semantics as the PyTorch forward).
    pooled_ref = jnp.mean(h[:, 1:, :], axis=1)
    logits_ref = pooled_ref @ head_w.T + head_b
    assert logits.shape == (B, C)
    assert jnp.allclose(logits, logits_ref, atol=1e-4, rtol=1e-4)

    print("KERNEL_OK")
</pallas_src>

<mosaic_0001>
module attributes {stable_mosaic.version = 11 : i64} {
  func.func @clip_head_kernel(%arg0: i32, %arg1: memref<2x8x32xf32, #tpu.memory_space<vmem>>, %arg2: memref<128x32xf32, #tpu.memory_space<vmem>>, %arg3: memref<1x128xf32, #tpu.memory_space<vmem>>, %arg4: memref<2x128xf32, #tpu.memory_space<vmem>>) attributes {dimension_semantics = [#tpu.dimension_semantics<parallel>], iteration_bounds = array<i64: 1>, scalar_prefetch = 0 : i64, scratch_operands = 0 : i64, tpu.core_type = #tpu.core_type<tc>, window_params = [{transform_indices = @transform_0, window_bounds = array<i64: 2, 8, 32>}, {pipeline_mode = #tpu.pipeline_mode<synchronous>, transform_indices = @transform_1, window_bounds = array<i64: 128, 32>}, {pipeline_mode = #tpu.pipeline_mode<synchronous>, transform_indices = @transform_2, window_bounds = array<i64: 1, 128>}, {transform_indices = @transform_3, window_bounds = array<i64: 2, 128>}]} {
    %c0 = arith.constant 0 : index
    %c0_0 = arith.constant 0 : index
    %c0_1 = arith.constant 0 : index
    %0 = vector.load %arg1[%c0, %c0_0, %c0_1] : memref<2x8x32xf32, #tpu.memory_space<vmem>>, vector<2x8x32xf32>
    %cst = arith.constant dense<0.000000e+00> : vector<2x32xf32>
    %1 = vector.multi_reduction <add>, %0, %cst [1] : vector<2x8x32xf32> to vector<2x32xf32>
    %2 = vector.extract_strided_slice %0 {offsets = [0, 0, 0], sizes = [2, 1, 32], strides = [1, 1, 1]} : vector<2x8x32xf32> to vector<2x1x32xf32>
    %3 = vector.shape_cast %2 : vector<2x1x32xf32> to vector<2x32xf32>
    %4 = arith.subf %1, %3 : vector<2x32xf32>
    %cst_2 = arith.constant 0.142857149 : f32
    %5 = vector.broadcast %cst_2 : f32 to vector<2x32xf32>
    %6 = arith.mulf %4, %5 : vector<2x32xf32>
    %c0_3 = arith.constant 0 : index
    %c0_4 = arith.constant 0 : index
    %7 = vector.load %arg2[%c0_3, %c0_4] : memref<128x32xf32, #tpu.memory_space<vmem>>, vector<128x32xf32>
    %cst_5 = arith.constant dense<0.000000e+00> : vector<2x128xf32>
    %8 = tpu.matmul %6, %7, %cst_5 {dimension_numbers = #tpu.dot_dimension_numbers<[1], [1], [0], [0], [0, 0, 1, 0], [], []>} : vector<2x32xf32>, vector<128x32xf32>, vector<2x128xf32> -> vector<2x128xf32>
    %c0_6 = arith.constant 0 : index
    %c0_7 = arith.constant 0 : index
    %9 = vector.load %arg3[%c0_6, %c0_7] : memref<1x128xf32, #tpu.memory_space<vmem>>, vector<1x128xf32>
    %10 = vector.broadcast %9 : vector<1x128xf32> to vector<2x128xf32>
    %11 = arith.addf %8, %10 : vector<2x128xf32>
    %c0_8 = arith.constant 0 : index
    %c0_9 = arith.constant 0 : index
    %12 = vector.load %arg4[%c0_8, %c0_9] : memref<2x128xf32, #tpu.memory_space<vmem>>, vector<2x128xf32>
    tpu.vector_store %arg4[%c0_8, %c0_9], %11 {strides = array<i32>} : memref<2x128xf32, #tpu.memory_space<vmem>>, vector<2x128xf32>,
    return
  }
  func.func @transform_0(%arg0: i32) -> (i32, i32, i32) {
    %c0_i32 = arith.constant 0 : i32
    %c0_i32_0 = arith.constant 0 : i32
    %c0_i32_1 = arith.constant 0 : i32
    return %arg0, %c0_i32, %c0_i32_0 : i32, i32, i32
  }
  func.func @transform_1(%arg0: i32) -> (i32, i32) {
    %c0_i32 = arith.constant 0 : i32
    %c0_i32_0 = arith.constant 0 : i32
    %c0_i32_1 = arith.constant 0 : i32
    return %c0_i32, %c0_i32_0 : i32, i32
  }
  func.func @transform_2(%arg0: i32) -> (i32, i32) {
    %c0_i32 = arith.constant 0 : i32
    %c0_i32_0 = arith.constant 0 : i32
    %c0_i32_1 = arith.constant 0 : i32
    return %c0_i32, %c0_i32_0 : i32, i32
  }
  func.func @transform_3(%arg0: i32) -> (i32, i32) {
    %c0_i32 = arith.constant 0 : i32
    %c0_i32_0 = arith.constant 0 : i32
    return %arg0, %c0_i32 : i32, i32
  }
}

</mosaic_0001>

<llo_original>
// kernel: tpu_custom_call.1
$region0: #{tpu_custom_call.1}
  #allocation0 [shape = 'u32[]', space=smem, size = 0x4, offset = 0x4, fixed_abs, tag = 'smem constant byte address 0x4 - core index']
  #allocation1 [shape = 'u32[144,128]{1,0:T(1,128)}', space=vmem, size = 0x12000, scoped, tag = 'internal scratch']
  %s0 = inlined_call_operand.vmem [shape: f32[2,8,32], index: 0, kind: input, shape index: {}]
  %s1 = inlined_call_operand.vmem [shape: f32[128,32], index: 1, kind: input, shape index: {}]
  %s2 = inlined_call_operand.vmem [shape: f32[1,128], index: 2, kind: input, shape index: {}]
  %s3 = inlined_call_operand.hbm [shape: f32[2,128], index: 3, kind: output, shape index: {}]
  %s4 = sld [smem:[#allocation0]]
  $region22: #{tpu_custom_call.1} parent=0
    _
  %s6 = ssub.s32 1, %s4
  %s7 = scalar_select 0, %s6, %s4
  $region1: #{tpu_custom_call.1} parent=0
    #allocation2 [shape = 'u8[1024]{0}', space=vmem, size = 0x400, scoped, tag = 'output window, operand 0, single buffered']
    #allocation3 [shape = 's32[1]{0}', space=sflag, size = 0x4, scoped, tag = 'scoped memory for tpu_custom_call.1']
    %8 = vsyncpa [#allocation3], 0
    // Predicated region
    $region2: #{tpu_custom_call.1} parent=1 // pred_check
      _
    $region3: #{tpu_custom_call.1} parent=1 // pred_check_branch
      %10 = sbr.rel (0) target = $region5
    $region4: #{tpu_custom_call.1} parent=1 // pred_region
      _
    $region5: #{tpu_custom_call.1} parent=1 // pred_fallthru
      _
    // Predicated region
    $region6: #{tpu_custom_call.1} parent=1 // pred_check
      _
    $region7: #{tpu_custom_call.1} parent=1 // pred_check_branch
      %12 = sbr.rel (0) target = $region9
    $region8: #{tpu_custom_call.1} parent=1 // pred_region
      _
    $region9: #{tpu_custom_call.1} parent=1 // pred_fallthru
      _
    // Predicated region
    $region10: #{tpu_custom_call.1} parent=1 // pred_check
      _
    $region11: #{tpu_custom_call.1} parent=1 // pred_check_branch
      %14 = sbr.rel (0) target = $region13
    $region12: #{tpu_custom_call.1} parent=1 // pred_region
      _
    $region13: #{tpu_custom_call.1} parent=1 // pred_fallthru
      _
    %v15 = vld [vmem:[%s0] sm:$0xff]
    %v16 = vld [vmem:[%s0 + $0x8] sm:$0xff]
    %vm17 = vcmask 261120
    %v18 = vsel %vm17, %v15, 0.0
    %v19 = vrot.slane %v18, 4
    %v20 = vadd.f32 %v18, %v19
    %v21 = vrot.slane %v20, 2
    %v22 = vadd.f32 %v20, %v21
    %v23 = vrot.slane %v22, 1
    %v24 = vadd.f32 %v22, %v23
    %v25 = vsel %vm17, %v16, 0.0
    %v26 = vrot.slane %v25, 4
    %v27 = vadd.f32 %v25, %v26
    %v28 = vrot.slane %v27, 2
    %v29 = vadd.f32 %v27, %v28
    %v30 = vrot.slane %v29, 1
    %v31 = vadd.f32 %v29, %v30
    %v32 = vsub.f32 %v24, %v15
    %v33 = vsub.f32 %v31, %v16
    %v34 = vmul.f32 %v32, 0.14285715
    %v35 = vmul.f32 %v33, 0.14285715
    %v36 = vld [vmem:[%s1] sm:$0xff]
    %v37 = vld [vmem:[%s1 + $0x8] sm:$0xff]
    %v38 = vld [vmem:[%s1 + $0x10] sm:$0xff]
    %v39 = vld [vmem:[%s1 + $0x18] sm:$0xff]
    %v40 = vld [vmem:[%s1 + $0x20] sm:$0xff]
    %v41 = vld [vmem:[%s1 + $0x28] sm:$0xff]
    %v42 = vld [vmem:[%s1 + $0x30] sm:$0xff]
    %v43 = vld [vmem:[%s1 + $0x38] sm:$0xff]
    %v44 = vld [vmem:[%s1 + $0x40] sm:$0xff]
    %v45 = vld [vmem:[%s1 + $0x48] sm:$0xff]
    %v46 = vld [vmem:[%s1 + $0x50] sm:$0xff]
    %v47 = vld [vmem:[%s1 + $0x58] sm:$0xff]
    %v48 = vld [vmem:[%s1 + $0x60] sm:$0xff]
    %v49 = vld [vmem:[%s1 + $0x68] sm:$0xff]
    %v50 = vld [vmem:[%s1 + $0x70] sm:$0xff]
    %v51 = vld [vmem:[%s1 + $0x78] sm:$0xff]
    %v52 = vld [vmem:[%s2] sm:$0x1]
    %v54 = vlaneseq
    %v55 = vshrl.u32 %v54, 7
    %v56 = vsub.s32 0, %v55
    %v57 = vrot.slane %v52, %v56
    %v61 = vrot.slane %v35, 7
    %vm62 = vcmask 1041409
    %v63 = vsel %vm62, %v61, %v34
    %v64 = vsel %vm17, %v63, 0
    %v67 = vsel %vm17, %v36, 0
    %v70 = vsel %vm17, %v37, 0
    %v73 = vsel %vm17, %v38, 0
    %v76 = vsel %vm17, %v39, 0
    %v79 = vsel %vm17, %v40, 0
    %v82 = vsel %vm17, %v41, 0
    %v85 = vsel %vm17, %v42, 0
    %v88 = vsel %vm17, %v43, 0
    %v91 = vsel %vm17, %v44, 0
    %v94 = vsel %vm17, %v45, 0
    %v97 = vsel %vm17, %v46, 0
    %v100 = vsel %vm17, %v47, 0
    %v103 = vsel %vm17, %v48, 0
    %v106 = vsel %vm17, %v49, 0
    %v109 = vsel %vm17, %v50, 0
    %v112 = vsel %vm17, %v51, 0
    %114 = vmatprep.subr.mxu0 0.0
    %115 = vmatpush1.xpose.msra.mxu0 %v67
    %116 = vmatprep.subr.mxu0 0.0
    %117 = vmatpush1.xpose.msra.mxu0 %v70
    %118 = vmatprep.subr.mxu0 0.0
    %119 = vmatpush1.xpose.msra.mxu0 %v73
    %120 = vmatprep.subr.mxu0 0.0
    %121 = vmatpush1.xpose.msra.mxu0 %v76
    %122 = vmatprep.subr.mxu0 0.0
    %123 = vmatpush1.xpose.msra.mxu0 %v79
    %124 = vmatprep.subr.mxu0 0.0
    %125 = vmatpush1.xpose.msra.mxu0 %v82
    %126 = vmatprep.subr.mxu0 0.0
    %127 = vmatpush1.xpose.msra.mxu0 %v85
    %128 = vmatprep.subr.mxu0 0.0
    %129 = vmatpush1.xpose.msra.mxu0 %v88
    %130 = vmatprep.subr.mxu0 0.0
    %131 = vmatpush1.xpose.msra.mxu0 %v91
    %132 = vmatprep.subr.mxu0 0.0
    %133 = vmatpush1.xpose.msra.mxu0 %v94
    %134 = vmatprep.subr.mxu0 0.0
    %135 = vmatpush1.xpose.msra.mxu0 %v97
    %136 = vmatprep.subr.mxu0 0.0
    %137 = vmatpush1.xpose.msra.mxu0 %v100
    %138 = vmatprep.subr.mxu0 0.0
    %139 = vmatpush1.xpose.msra.mxu0 %v103
    %140 = vmatprep.subr.mxu0 0.0
    %141 = vmatpush1.xpose.msra.mxu0 %v106
    %142 = vmatprep.subr.mxu0 0.0
    %143 = vmatpush1.xpose.msra.mxu0 %v109
    %144 = vmatprep.subr.mxu0 0.0
    %145 = vmatpush1.xpose.msra.mxu0 %v112
    %146 = vmatprep.subr.mxu0 0.0
    %147 = vmatpush1.xpose.msra.mxu0 0.0
    %148 = vmatprep.subr.mxu0 0.0
    %149 = vmatpush1.xpose.msra.mxu0 0.0
    %150 = vmatprep.subr.mxu0 0.0
    %151 = vmatpush1.xpose.msra.mxu0 0.0
    %152 = vmatprep.subr.mxu0 0.0
    %153 = vmatpush1.xpose.msra.mxu0 0.0
    %154 = vmatprep.subr.mxu0 0.0
    %155 = vmatpush1.xpose.msra.mxu0 0.0
    %156 = vmatprep.subr.mxu0 0.0
    %157 = vmatpush1.xpose.msra.mxu0 0.0
    %158 = vmatprep.subr.mxu0 0.0
    %159 = vmatpush1.xpose.msra.mxu0 0.0
    %160 = vmatprep.subr.mxu0 0.0
    %161 = vmatpush1.xpose.msra.mxu0 0.0
    %162 = vmatprep.subr.mxu0 0.0
    %163 = vmatpush1.xpose.msra.mxu0 0.0
    %164 = vmatprep.subr.mxu0 0.0
    %165 = vmatpush1.xpose.msra.mxu0 0.0
    %166 = vmatprep.subr.mxu0 0.0
    %167 = vmatpush1.xpose.msra.mxu0 0.0
    %168 = vmatprep.subr.mxu0 0.0
    %169 = vmatpush1.xpose.msra.mxu0 0.0
    %170 = vmatprep.subr.mxu0 0.0
    %171 = vmatpush1.xpose.msra.mxu0 0.0
    %172 = vmatprep.subr.mxu0 0.0
    %173 = vmatpush1.xpose.msra.mxu0 0.0
    %174 = vmatprep.subr.mxu0 0.0
    %175 = vmatpush1.xpose.msra.mxu0 0.0
    %176 = vmatprep.subr.mxu0 0.0
    %177 = vmatpush1.xpose.msra.mxu0 0.0
    %178 = vmatprep.mubr.f32.mxu0 0.0
    %179 = vmatmul.mubr.f32.gmra.mrb[0].mxu0 %v64
    %v180 = vpop.f32.mrb[0].mxu0
    %v181 = vadd.f32 %v57, %v180
    %v182 = vpop.f32.mrb[0].mxu0
    %183 = vdwg.mxu0
    %184 = vst [vmem:[#allocation2] sm:$0x3] %v181
    // Predicated region
    $region14: #{tpu_custom_call.1} parent=1 // pred_check
      _
    $region15: #{tpu_custom_call.1} parent=1 // pred_check_branch
      %186 = sbr.rel (0) target = $region17
    $region16: #{tpu_custom_call.1} parent=1 // pred_region
      %s188 = ssub.s32 32, 32
      %189 = vsyncadd [#allocation3], %s188
      %s191 = sshll.u32 [#allocation2], 4
      %s192 = int_to_ptr.vmem [resolvable:$true] %s191
      %194 = dma.vmem_to_hbm [thread:$0]  %s192, 32, %s3, [#allocation3]
    $region17: #{tpu_custom_call.1} parent=1 // pred_fallthru
      _
    // Predicated region
    $region18: #{tpu_custom_call.1} parent=1 // pred_check
      _
    $region19: #{tpu_custom_call.1} parent=1 // pred_check_branch
      %196 = sbr.rel (0) target = $region21
    $region20: #{tpu_custom_call.1} parent=1 // pred_region
      %197 = dma.done [#allocation3], 32
    $region21: #{tpu_custom_call.1} parent=1 // pred_fallthru
      _
    %198 = vsyncpa [#allocation3], 1

</llo_original>
